<compile_context>
chip_gen: v7x
topology: tpu7x:2x2x1
jax: 0.10.0
libtpu: 0.0.40
codegen_flags: <defaults>
</compile_context>

<pallas_src>
import functools

import jax
import jax.numpy as jnp
from jax import lax
from jax.experimental import pallas as pl
from jax.experimental.pallas import tpu as pltpu


_LANE = 512              # lane-dense slab width (multiple of 128)
_TARGET_TILE_ROWS = 2048  # ~4 MiB per f32 tile at LANE=512 (2 buffers -> 8 MiB)
_NUM_CORES = 2            # leading "parallel" grid axis: 2x on v7x, no-op on v5e/v6e


def _abs_pow(x, p: float):
    """|x|**p using VPU-only repeated multiplies for small integer p."""
    if p == 1.0:
        return jnp.abs(x)
    if p == 2.0:
        return x * x
    if float(p).is_integer() and 0.0 < p <= 16.0:
        ip = int(p)
        x2 = x * x
        if ip % 2 == 0:
            acc = x2
            extra = ip // 2 - 1
        else:
            acc = jnp.abs(x)
            extra = ip // 2
        for _ in range(extra):
            acc = acc * x2
        return acc
    # generic non-integer p: EUP exp/log path
    return jnp.abs(x) ** jnp.float32(p)


def _powersum_kernel(x_ref, o_ref, *, p, rows, tile_rows, lane,
                     tiles_per_core, needs_mask):
    c = pl.program_id(0)   # core shard ("parallel")
    t = pl.program_id(1)   # row-tile within shard ("arbitrary" reduction)

    @pl.when(t == 0)
    def _init():
        o_ref[...] = jnp.zeros_like(o_ref)

    x = x_ref[...].astype(jnp.float32)   # per-tile widening (bf16 stays bf16 in HBM)
    v = _abs_pow(x, p)

    if needs_mask:
        # Rows past the true extent (partial boundary tile, or surplus grid steps
        # whose DMA index was clamped to the last tile) must not contribute.
        tile_idx = c * tiles_per_core + t
        row_start = tile_idx * tile_rows
        row_ids = lax.broadcasted_iota(jnp.int32, (tile_rows, lane), 0)
        v = jnp.where(row_start + row_ids < rows, v, jnp.float32(0.0))

    # Fold sublane groups with pure VPU adds; the single cross-lane/XLU reduce of
    # the (NUM_CORES, acc_rows, LANE) partials happens once, in the wrapper.
    if tile_rows % 8 == 0 and tile_rows > 8:
        part = jnp.sum(jnp.reshape(v, (tile_rows // 8, 8, lane)), axis=0)
    else:
        part = v
    o_ref[...] += part


def power_sum_regularizer_forward(x, *, p: float = 2.0, dim: int = -1,
                                  normalize: bool = False):
    """Pallas implementation of PowerSumRegularizer.forward (returns f32 scalar)."""
    assert x.size > 0, "empty input"
    assert p > 0.0, "masking/zero-padding assumes |0|^p == 0, i.e. p > 0"
    p = float(p)

    D = x.shape[dim]
    M = x.size // D
    # mean over the M non-reduced positions (+ optional 1/D normalization)
    scale = (1.0 / M) * (1.0 / D if normalize else 1.0)

    # The result is a flat sum times a scalar, so flatten everything; `dim` only
    # enters through `scale` -> no moveaxis / transpose copy is ever needed.
    x_flat = jnp.reshape(x, (-1,))
    n = x_flat.shape[0]

    lane = _LANE if n >= _LANE else 128
    if n < lane:  # degenerate tiny input: pad < 128 elems (zeros contribute 0)
        x_flat = jnp.pad(x_flat, (0, lane - n))
    n_total = x_flat.shape[0]
    n_main = (n_total // lane) * lane
    rows = n_main // lane

    # Ragged tail (< lane elements) summed in plain jnp -> no full-array pad/copy.
    if n_main != n_total:
        x2 = jnp.reshape(x_flat[:n_main], (rows, lane))
        tail_sum = jnp.sum(_abs_pow(x_flat[n_main:].astype(jnp.float32), p))
    else:
        x2 = jnp.reshape(x_flat, (rows, lane))
        tail_sum = jnp.float32(0.0)

    tile_rows = min(_TARGET_TILE_ROWS, rows)          # full extent allowed if < 8-mult
    acc_rows = 8 if tile_rows % 8 == 0 else tile_rows
    tiles_total = -(-rows // tile_rows)
    tiles_per_core = -(-tiles_total // _NUM_CORES)
    grid_even = (_NUM_CORES * tiles_per_core == tiles_total)
    rows_even = (tiles_total * tile_rows == rows)
    needs_mask = (not grid_even) or (not rows_even)

    if grid_even:
        def x_index_map(c, t):
            return (c * tiles_per_core + t, 0)
    else:
        last_tile = tiles_total - 1

        def x_index_map(c, t):
            # clamp surplus grid steps onto the last valid tile (DMA stays in
            # bounds; the kernel-side row mask zeroes their contribution)
            return (jnp.minimum(c * tiles_per_core + t, last_tile), 0)

    kernel = functools.partial(
        _powersum_kernel, p=p, rows=rows, tile_rows=tile_rows, lane=lane,
        tiles_per_core=tiles_per_core, needs_mask=needs_mask)

    itemsize = jnp.dtype(x2.dtype).itemsize
    generic_p = not (p in (1.0, 2.0) or (float(p).is_integer() and 0.0 < p <= 16.0))
    cost = pl.CostEstimate(
        flops=2 * n_main,
        transcendentals=(2 * n_main if generic_p else 0),
        bytes_accessed=n_main * itemsize + _NUM_CORES * acc_rows * lane * 4)

    partials = pl.pallas_call(
        kernel,
        out_shape=jax.ShapeDtypeStruct((_NUM_CORES, acc_rows, lane), jnp.float32),
        grid_spec=pltpu.PrefetchScalarGridSpec(
            num_scalar_prefetch=0,
            grid=(_NUM_CORES, tiles_per_core),
            in_specs=[pl.BlockSpec((tile_rows, lane), x_index_map)],
            out_specs=pl.BlockSpec((None, acc_rows, lane), lambda c, t: (c, 0, 0)),
        ),
        compiler_params=pltpu.CompilerParams(
            dimension_semantics=("parallel", "arbitrary"),
            vmem_limit_bytes=32 * 1024 * 1024,
        ),
        cost_estimate=cost,
    )(x2)

    total = jnp.sum(partials) + tail_sum
    return (total * jnp.float32(scale)).astype(jnp.float32)


if __name__ == "__main__":
    key = jax.random.PRNGKey(0)
    k1, k2 = jax.random.split(key)

    # Small embedding-like input, e.g. a batch of entity embeddings.
    x = jax.random.normal(k1, (2, 4, 16, 16), dtype=jnp.float32)

    # Module defaults: p=2.0, dim=-1, normalize=False
    result = jax.block_until_ready(power_sum_regularizer_forward(x))
    ref = jnp.mean(jnp.sum(jnp.abs(x) ** 2.0, axis=-1))
    assert jnp.allclose(result, ref, rtol=1e-5, atol=1e-5), (result, ref)

    # p=3 / normalize=True path (multiply-based |x|^p, no transcendentals)
    r2 = jax.block_until_ready(
        power_sum_regularizer_forward(x, p=3.0, dim=-1, normalize=True))
    ref2 = jnp.mean(jnp.sum(jnp.abs(x) ** 3.0, axis=-1) / x.shape[-1])
    assert jnp.allclose(r2, ref2, rtol=1e-4, atol=1e-5), (r2, ref2)

    # ragged element count + bf16 input + dim != -1:
    # exercises per-tile cast, in-kernel row masking, clamped index map, jnp tail.
    xb = jax.random.normal(k2, (3, 5, 7, 24), dtype=jnp.bfloat16)
    r3 = jax.block_until_ready(
        power_sum_regularizer_forward(xb, p=2.0, dim=1, normalize=True))
    xf = xb.astype(jnp.float32)
    ref3 = jnp.mean(jnp.sum(jnp.abs(xf) ** 2.0, axis=1) / xf.shape[1])
    assert jnp.allclose(r3, ref3, rtol=1e-3, atol=1e-5), (r3, ref3)

    print("KERNEL_OK")
</pallas_src>

<mosaic_0001>
module attributes {stable_mosaic.version = 11 : i64} {
  func.func @_powersum_kernel(%arg0: i32, %arg1: i32, %arg2: memref<4x512xf32, #tpu.memory_space<vmem>>, %arg3: memref<1x4x512xf32, #tpu.memory_space<vmem>>) attributes {dimension_semantics = [#tpu.dimension_semantics<parallel>, #tpu.dimension_semantics<arbitrary>], iteration_bounds = array<i64: 2, 1>, scalar_prefetch = 0 : i64, scratch_operands = 0 : i64, tpu.core_type = #tpu.core_type<tc>, window_params = [{transform_indices = @transform_0, window_bounds = array<i64: 4, 512>}, {transform_indices = @transform_1, window_bounds = array<i64: 1, 4, 512>}]} {
    %c0_i32 = arith.constant 0 : i32
    %0 = arith.cmpi eq, %arg1, %c0_i32 : i32
    %1 = arith.extui %0 : i1 to i32
    %c0_i32_0 = arith.constant 0 : i32
    %2 = arith.cmpi ne, %1, %c0_i32_0 : i32
    scf.if %2 {
      %cst_9 = arith.constant 0.000000e+00 : f32
      %21 = vector.broadcast %cst_9 : f32 to vector<4x512xf32>
      %c0_10 = arith.constant 0 : index
      %c0_11 = arith.constant 0 : index
      %c0_12 = arith.constant 0 : index
      %22 = vector.load %arg3[%c0_10, %c0_11, %c0_12] : memref<1x4x512xf32, #tpu.memory_space<vmem>>, vector<1x4x512xf32>
      %23 = vector.shape_cast %22 : vector<1x4x512xf32> to vector<4x512xf32>
      %24 = vector.shape_cast %21 : vector<4x512xf32> to vector<1x4x512xf32>
      tpu.vector_store %arg3[%c0_10, %c0_11, %c0_12], %24 {strides = array<i32>} : memref<1x4x512xf32, #tpu.memory_space<vmem>>, vector<1x4x512xf32>,
    } else {
    }
    %c0 = arith.constant 0 : index
    %c0_1 = arith.constant 0 : index
    %3 = vector.load %arg2[%c0, %c0_1] : memref<4x512xf32, #tpu.memory_space<vmem>>, vector<4x512xf32>
    %4 = arith.mulf %3, %3 : vector<4x512xf32>
    %c1_i32 = arith.constant 1 : i32
    %5 = arith.muli %arg0, %c1_i32 : i32
    %6 = arith.addi %5, %arg1 : i32
    %c4_i32 = arith.constant 4 : i32
    %7 = arith.muli %6, %c4_i32 : i32
    %8 = tpu.iota {dimensions = array<i32: 0>} : vector<4x512xi32>
    %9 = vector.broadcast %7 : i32 to vector<4x512xi32>
    %10 = arith.addi %9, %8 : vector<4x512xi32>
    %c4_i32_2 = arith.constant 4 : i32
    %11 = vector.broadcast %c4_i32_2 : i32 to vector<4x512xi32>
    %12 = arith.cmpi slt, %10, %11 : vector<4x512xi32>
    %cst = arith.constant 0.000000e+00 : f32
    %13 = vector.broadcast %cst : f32 to vector<4x512xf32>
    %14 = arith.select %12, %4, %13 : vector<4x512xi1>, vector<4x512xf32>
    %c0_3 = arith.constant 0 : index
    %c0_4 = arith.constant 0 : index
    %c0_5 = arith.constant 0 : index
    %15 = vector.load %arg3[%c0_3, %c0_4, %c0_5] : memref<1x4x512xf32, #tpu.memory_space<vmem>>, vector<1x4x512xf32>
    %16 = vector.shape_cast %15 : vector<1x4x512xf32> to vector<4x512xf32>
    %17 = arith.addf %16, %14 : vector<4x512xf32>
    %c0_6 = arith.constant 0 : index
    %c0_7 = arith.constant 0 : index
    %c0_8 = arith.constant 0 : index
    %18 = vector.load %arg3[%c0_6, %c0_7, %c0_8] : memref<1x4x512xf32, #tpu.memory_space<vmem>>, vector<1x4x512xf32>
    %19 = vector.shape_cast %18 : vector<1x4x512xf32> to vector<4x512xf32>
    %20 = vector.shape_cast %17 : vector<4x512xf32> to vector<1x4x512xf32>
    tpu.vector_store %arg3[%c0_6, %c0_7, %c0_8], %20 {strides = array<i32>} : memref<1x4x512xf32, #tpu.memory_space<vmem>>, vector<1x4x512xf32>,
    return
  }
  func.func @transform_0(%arg0: i32, %arg1: i32) -> (i32, i32) {
    %c1_i32 = arith.constant 1 : i32
    %0 = arith.muli %arg0, %c1_i32 : i32
    %1 = arith.addi %0, %arg1 : i32
    %c0_i32 = arith.constant 0 : i32
    %2 = arith.minsi %1, %c0_i32 : i32
    %c0_i32_0 = arith.constant 0 : i32
    %c0_i32_1 = arith.constant 0 : i32
    return %2, %c0_i32_0 : i32, i32
  }
  func.func @transform_1(%arg0: i32, %arg1: i32) -> (i32, i32, i32) {
    %c0_i32 = arith.constant 0 : i32
    %c0_i32_0 = arith.constant 0 : i32
    %c0_i32_1 = arith.constant 0 : i32
    return %arg0, %c0_i32, %c0_i32_0 : i32, i32, i32
  }
}

</mosaic_0001>

<llo_original>
// kernel: tpu_custom_call.1
$region0: #{tpu_custom_call.1}
  #allocation0 [shape = 'u32[]', space=smem, size = 0x4, offset = 0x4, fixed_abs, tag = 'smem constant byte address 0x4 - core index']
  #allocation1 [shape = 'u32[144,128]{1,0:T(1,128)}', space=vmem, size = 0x12000, scoped, tag = 'internal scratch']
  %s0 = inlined_call_operand.hbm [shape: f32[4,512], index: 0, kind: input, shape index: {}]
  %s1 = inlined_call_operand.hbm [shape: f32[2,4,512], index: 1, kind: output, shape index: {}]
  %s2 = sld [smem:[#allocation0]]
  $region45: #{tpu_custom_call.1} parent=0
    _
  %s4 = ssub.s32 1, %s2
  %s5 = scalar_select 0, %s4, %s2
  $region1: #{tpu_custom_call.1} parent=0
    #allocation2 [shape = 'u8[16384]{0}', space=vmem, size = 0x4000, scoped, tag = 'input window, operand 0']
    #allocation3 [shape = 's32[2]{0}', space=sflag, size = 0x8, scoped, tag = 'scoped memory for tpu_custom_call.1']
    #allocation4 [shape = 's32[2]{0}', space=sflag, size = 0x8, scoped, tag = 'scoped memory for tpu_custom_call.1']
    #allocation5 [shape = 'u8[16384]{0}', space=vmem, size = 0x4000, scoped, tag = 'output window, operand 0']
    %6 = vsyncpa [#allocation3], 0
    %s7 = scalar_lea.sflag [#allocation3], 1
    %8 = vsyncpa %s7, 0
    %9 = vsyncpa [#allocation4], 0
    %s10 = scalar_lea.sflag [#allocation4], 1
    %11 = vsyncpa %s10, 0
    loop: start=0, step=1, limit=4
    $region2: #{tpu_custom_call.1} parent=1 // loop_pre_header
      _
    $region3: #{tpu_custom_call.1} parent=1 // loop_header
      %s13 = sphi 0, %s17
      %p14 = scmp.ge.s32.totalorder %s13, 4
      %s20 = sphi 0, %s32
      %s21 = sphi 0, %s28
      %s22 = sphi 0, %s20
      %s23 = sphi 0, %s21
      %s24 = sphi 0, %s22
      %s25 = sphi 0, %s23
      %s41 = sphi 0, %s43
      %s44 = sphi 0, %s41
      %s45 = sphi 0, %s44
      %s61 = sphi 0, %s45
      %s67 = sphi 0, %s69
      %s70 = sphi 0, %s67
      %s71 = sphi 0, %s70
      %s87 = sphi 0, %s71
    $region4: #{tpu_custom_call.1} parent=1 // loop_header_branch
      %16 = sbr.rel (%p14) target = $region8
    $region5: #{tpu_custom_call.1} parent=1 // loop_body
      %s18 = ssub.s32 %s13, 1
      %s19 = ssub.s32 %s13, 2
      %s26 = sadd.s32 1, %s21
      %p27 = scmp.ge.s32.totalorder %s26, 1
      %s28 = scalar_select %p27, 0, %s26
      %s29 = sadd.s32 1, %s20
      %s30 = scalar_select %p27, %s29, %s20
      %p31 = scmp.ge.s32.totalorder %s30, 2
      %s32 = scalar_select %p31, 0, %s30
      %s33 = sadd.s32 %s20, %s21
      %p34 = scmp.lt.s32.totalorder %s33, 0
      %s35 = scalar_select %p34, %s33, 0
      %s36 = sadd.s32 %s32, %s28
      %p37 = scmp.lt.s32.totalorder %s36, 0
      %s38 = scalar_select %p37, %s36, 0
      %s39 = ssub.s32 %s35, %s38
      %p40 = scmp.eq.s32.totalorder %s39, 0
      %s42 = sadd.s32 %s41, 1
      %s43 = scalar_select %p40, %s41, %s42
      %p46 = pneg %p40
      %p47 = scmp.eq.s32.totalorder %s13, 1
      %p48 = por %p46, %p47
      %p49 = scmp.ne.s32.totalorder %s41, %s44
      %p50 = scmp.eq.s32.totalorder %s13, 0
      %p51 = por %p49, %p50
      %p52 = scmp.ne.s32.totalorder %s41, %s44
      %p53 = scmp.eq.s32.totalorder %s18, 1
      %p54 = por %p52, %p53
      %p55 = scmp.ne.s32.totalorder %s44, %s45
      %p56 = scmp.eq.s32.totalorder %s18, 0
      %p57 = por %p55, %p56
      %p58 = scmp.ne.s32.totalorder %s44, %s45
      %p59 = scmp.eq.s32.totalorder %s19, 1
      %p60 = por %p58, %p59
      %p62 = scmp.ne.s32.totalorder %s45, %s61
      %p63 = scmp.eq.s32.totalorder %s19, 0
      %p64 = por %p62, %p63
      %s65 = ssub.s32 %s20, %s32
      %p66 = scmp.eq.s32.totalorder %s65, 0
      %s68 = sadd.s32 %s67, 1
      %s69 = scalar_select %p66, %s67, %s68
      %p72 = pneg %p66
      %p73 = scmp.eq.s32.totalorder %s13, 1
      %p74 = por %p72, %p73
      %p75 = scmp.ne.s32.totalorder %s67, %s70
      %p76 = scmp.eq.s32.totalorder %s13, 0
      %p77 = por %p75, %p76
      %p78 = scmp.ne.s32.totalorder %s67, %s70
      %p79 = scmp.eq.s32.totalorder %s18, 1
      %p80 = por %p78, %p79
      %p81 = scmp.ne.s32.totalorder %s70, %s71
      %p82 = scmp.eq.s32.totalorder %s18, 0
      %p83 = por %p81, %p82
      %p84 = scmp.ne.s32.totalorder %s70, %s71
      %p85 = scmp.eq.s32.totalorder %s19, 1
      %p86 = por %p84, %p85
      %p88 = scmp.ne.s32.totalorder %s71, %s87
      %p89 = scmp.eq.s32.totalorder %s19, 0
      %p90 = por %p88, %p89
      %p91 = scmp.le.s32.totalorder 1, %s13
      %p92 = scmp.lt.s32.totalorder %s13, 3
      %p93 = pnand %p91, %p92
      %p94 = pneg %p93
      // Predicated region
      $region9: #{tpu_custom_call.1} parent=5 // pred_check
        _
      $region10: #{tpu_custom_call.1} parent=5 // pred_check_branch
        %96 = sbr.rel (%p93) target = $region12
      $region11: #{tpu_custom_call.1} parent=5 // pred_region
        %s97 = ssub.s32 %s13, 1
      $region12: #{tpu_custom_call.1} parent=5 // pred_fallthru
        _
      %p98 = scmp.lt.s32.totalorder %s13, 2
      // Predicated region
      $region13: #{tpu_custom_call.1} parent=5 // pred_check
        %p99 = pneg %p98
      $region14: #{tpu_custom_call.1} parent=5 // pred_check_branch
        %101 = sbr.rel (%p99) target = $region16
      $region15: #{tpu_custom_call.1} parent=5 // pred_region
        // Predicated region
        $region17: #{tpu_custom_call.1} parent=15 // pred_check
          %p102 = pneg %p51
        $region18: #{tpu_custom_call.1} parent=15 // pred_check_branch
          %104 = sbr.rel (%p102) target = $region20
        $region19: #{tpu_custom_call.1} parent=15 // pred_region
          %s105 = sand.u32 %s41, 1
          %s106 = scalar_lea.sflag [#allocation3], %s105
          %s107 = sand.u32 %s41, 1
          %s108 = smul.addr %s107, 16
          %s109 = scalar_lea.vmem [#allocation2], %s108
          %s110 = sadd.s32 %s20, %s21
          %p111 = scmp.lt.s32.totalorder %s110, 0
          %s112 = scalar_select %p111, %s110, 0
          %s114 = ssub.s32 256, 256
          %115 = vsyncadd %s106, %s114
          %s116 = smul.addr %s112, 4
          %s117 = smul.addr %s116, 64
          %s118 = scalar_lea.hbm %s0, %s117
          %s120 = sshll.u32 %s109, 4
          %s121 = int_to_ptr.vmem [resolvable:$true] %s120
          %123 = dma.hbm_to_vmem [thread:$0]  %s118, 256, %s121, %s106
        $region20: #{tpu_custom_call.1} parent=15 // pred_fallthru
          _
      $region16: #{tpu_custom_call.1} parent=5 // pred_fallthru
        _
      %p124 = scmp.le.s32.totalorder 1, %s13
      %p125 = scmp.lt.s32.totalorder %s13, 3
      %p126 = pnand %p124, %p125
      %p127 = pneg %p126
      // Predicated region
      $region21: #{tpu_custom_call.1} parent=5 // pred_check
        _
      $region22: #{tpu_custom_call.1} parent=5 // pred_check_branch
        %129 = sbr.rel (%p126) target = $region24
      $region23: #{tpu_custom_call.1} parent=5 // pred_region
        %s130 = ssub.s32 %s13, 1
        %s131 = sand.u32 %s44, 1
        %s132 = scalar_lea.sflag [#allocation3], %s131
        %s133 = sand.u32 %s44, 1
        %s134 = smul.addr %s133, 16
        %s135 = scalar_lea.vmem [#allocation2], %s134
        // Predicated region
        $region25: #{tpu_custom_call.1} parent=23 // pred_check
          %p136 = pneg %p57
        $region26: #{tpu_custom_call.1} parent=23 // pred_check_branch
          %138 = sbr.rel (%p136) target = $region28
        $region27: #{tpu_custom_call.1} parent=23 // pred_region
          %139 = dma.done %s132, 256
        $region28: #{tpu_custom_call.1} parent=23 // pred_fallthru
          _
        %s140 = sand.u32 %s44, 1
        %s141 = scalar_lea.sflag [#allocation3], %s140
        %s142 = sand.u32 %s44, 1
        %s143 = smul.addr %s142, 16
        %s144 = scalar_lea.vmem [#allocation2], %s143
        %p145 = pneg %p57
        %p146 = pneg %p54
        %p147 = pneg %p83
        %p148 = pneg %p80
        %s149 = sand.u32 %s70, 1
        %s150 = scalar_lea.sflag [#allocation4], %s149
        %s151 = sand.u32 %s70, 1
        %s152 = smul.addr %s151, 16
        %s153 = scalar_lea.vmem [#allocation5], %s152
        %s154 = sadd.s32 %s22, %s23
        %p155 = scmp.lt.s32.totalorder %s154, 0
        %s156 = scalar_select %p155, %s154, 0
        %p157 = scmp.eq.s32.totalorder %s23, 0
        // Predicated region
        $region29: #{tpu_custom_call.1} parent=23 // pred_check
          %p158 = pneg %p157
        $region30: #{tpu_custom_call.1} parent=23 // pred_check_branch
          %160 = sbr.rel (%p158) target = $region32
        $region31: #{tpu_custom_call.1} parent=23 // pred_region
          %161 = vst [vmem:[%s153] sm:$0xff] 0.0
          %162 = vst [vmem:[%s153 + $0x8] sm:$0xff] 0.0
        $region32: #{tpu_custom_call.1} parent=23 // pred_fallthru
          _
        %v163 = vld [vmem:[%s135] sm:$0xff]
        %v164 = vld [vmem:[%s135 + $0x8] sm:$0xff]
        %v165 = vmul.f32 %v163, %v163
        %v166 = vmul.f32 %v164, %v164
        %s167 = sadd.s32 %s22, %s23
        %s168 = smul.u32 %s167, 4
        %v169 = vlaneseq
        %v170 = vshrl.u32 %v169, 7
        %v171 = vstv %s168
        %v172 = vadd.s32 %v171, %v170
        %vm173 = vcmp.lt.s32.totalorder %v172, 4
        %v176 = vcombine.high %v165, %v165
        %v177 = vcombine.high %v166, %v166
        %v180 = vsel %vm173, %v165, 0.0
        %v181 = vsel %vm173, %v176, 0.0
        %v182 = vsel %vm173, %v166, 0.0
        %v183 = vsel %vm173, %v177, 0.0
        %v184 = vld [vmem:[%s153] sm:$0xff]
        %v185 = vld [vmem:[%s153 + $0x8] sm:$0xff]
        %v190 = vcombine.low %v180, %v181
        %v191 = vcombine.low %v182, %v183
        %v194 = vadd.f32 %v184, %v190
        %v195 = vadd.f32 %v185, %v191
        %196 = vst [vmem:[%s153] sm:$0xff] %v194
        %197 = vst [vmem:[%s153 + $0x8] sm:$0xff] %v195
        %s198 = sand.u32 %s70, 1
        %s199 = scalar_lea.sflag [#allocation4], %s198
        %s200 = sand.u32 %s70, 1
        %s201 = smul.addr %s200, 16
        %s202 = scalar_lea.vmem [#allocation5], %s201
        // Predicated region
        $region33: #{tpu_custom_call.1} parent=23 // pred_check
          %p203 = pneg %p80
        $region34: #{tpu_custom_call.1} parent=23 // pred_check_branch
          %205 = sbr.rel (%p203) target = $region36
        $region35: #{tpu_custom_call.1} parent=23 // pred_region
          %s207 = ssub.s32 256, 256
          %208 = vsyncadd %s199, %s207
          %s209 = smul.addr %s22, 4
          %s210 = smul.addr %s209, 64
          %s211 = scalar_lea.hbm %s1, %s210
          %s213 = sshll.u32 %s202, 4
          %s214 = int_to_ptr.vmem [resolvable:$true] %s213
          %216 = dma.vmem_to_hbm [thread:$0]  %s214, 256, %s211, %s199
        $region36: #{tpu_custom_call.1} parent=23 // pred_fallthru
          _
      $region24: #{tpu_custom_call.1} parent=5 // pred_fallthru
        _
      %p217 = scmp.le.s32.totalorder 2, %s13
      // Predicated region
      $region37: #{tpu_custom_call.1} parent=5 // pred_check
        %p218 = pneg %p217
      $region38: #{tpu_custom_call.1} parent=5 // pred_check_branch
        %220 = sbr.rel (%p218) target = $region40
      $region39: #{tpu_custom_call.1} parent=5 // pred_region
        %s221 = ssub.s32 %s13, 2
        // Predicated region
        $region41: #{tpu_custom_call.1} parent=39 // pred_check
          %p222 = pneg %p86
        $region42: #{tpu_custom_call.1} parent=39 // pred_check_branch
          %224 = sbr.rel (%p222) target = $region44
        $region43: #{tpu_custom_call.1} parent=39 // pred_region
          %s225 = sand.u32 %s71, 1
          %s226 = scalar_lea.sflag [#allocation4], %s225
          %s227 = sand.u32 %s71, 1
          %s228 = smul.addr %s227, 16
          %s229 = scalar_lea.vmem [#allocation5], %s228
          %230 = dma.done %s226, 256
        $region44: #{tpu_custom_call.1} parent=39 // pred_fallthru
          _
      $region40: #{tpu_custom_call.1} parent=5 // pred_fallthru
        _
    $region6: #{tpu_custom_call.1} parent=1 // loop_footer
      %s17 = sadd.s32 1, %s13
    $region7: #{tpu_custom_call.1} parent=1 // loop_footer_branch
      %12 = sbr.rel target = $region3
    $region8: #{tpu_custom_call.1} parent=1 // loop_exit
      _
    %231 = vsyncpa [#allocation3], 1
    %s232 = scalar_lea.sflag [#allocation3], 1
    %233 = vsyncpa %s232, 1
    %234 = vsyncpa [#allocation4], 1
    %s235 = scalar_lea.sflag [#allocation4], 1
    %236 = vsyncpa %s235, 1

</llo_original>
